<compile_context>
chip_gen: v7x
topology: tpu7x:2x2x1
jax: 0.10.0
libtpu: 0.0.40
codegen_flags: <defaults>
</compile_context>

<pallas_src>
import jax
import jax.numpy as jnp
from jax.experimental import pallas as pl
from jax.experimental.pallas import tpu as pltpu


def _round_up(a, m):
    return ((a + m - 1) // m) * m


def _make_cnn_kernel(*, TB, T_pad, T_out, F_pad):
    """Kernel factory with all static shape parameters baked in."""
    inv_t = float(1.0 / T_out)

    def kernel(p_ref, w_conv_ref, b_conv_ref, w_fc_ref, b_fc_ref,
               pooled_ref, logits_ref):
        # Conv1d as ONE lane-dense MXU matmul: (TB*T_pad, K) x (K, F_pad),
        # bf16 operands, f32 accumulation.
        conv = jnp.dot(p_ref[...], w_conv_ref[...],
                       preferred_element_type=jnp.float32)
        conv = conv + b_conv_ref[...]            # (TB*T_pad, F_pad) + (1, F_pad)
        relu = jnp.maximum(conv, 0.0)

        # (rows, F) -> (TB, T_pad, F): layout-free since T_pad % 8 == 0.
        relu3 = relu.reshape(TB, T_pad, F_pad)
        if T_pad != T_out:
            # Zero the T_out..T_pad padding rows so the time mean stays exact
            # (padded patch rows are zeros, so conv there equals the bias).
            t_idx = jax.lax.broadcasted_iota(jnp.int32, (TB, T_pad, F_pad), 1)
            relu3 = jnp.where(t_idx < T_out, relu3, 0.0)

        # AdaptiveAvgPool1d(1) == mean over the valid time positions.
        pooled = jnp.sum(relu3, axis=1) * inv_t               # (TB, F_pad) f32
        pooled_ref[...] = pooled.astype(pooled_ref.dtype)

        # Dropout: eval mode -> identity.  Linear(F -> C) on the MXU
        # (bf16 operands, f32 accumulation; bias added in f32).
        logits = jnp.dot(pooled.astype(w_fc_ref.dtype), w_fc_ref[...],
                         preferred_element_type=jnp.float32) + b_fc_ref[...]
        logits_ref[...] = logits.astype(logits_ref.dtype)

    return kernel


def cnn_forward(x, w_conv, b_conv, w_fc, b_fc, *, kernel_size, stride):
    """x: (B, 1, L) float32 (PyTorch NCW, C_in=1). Returns (pooled, logits)."""
    B, C_in, L = x.shape
    assert C_in == 1
    K, S = kernel_size, stride
    F = w_conv.shape[0]
    C = w_fc.shape[0]
    assert w_conv.shape == (F, 1, K)
    pad = K - S
    assert pad >= 0, "Conv1d padding = kernel_size - stride must be >= 0"
    Lp = L + 2 * pad
    T_out = (Lp - K) // S + 1
    assert T_out >= 1

    # ---- static tiling / padding decisions ----
    T_pad = _round_up(T_out, 8)              # sublane-aligned time axis
    F_pad = _round_up(F, 128)                # lane-dense conv channels
    C_pad = _round_up(C, 128)                # lane-dense logits
    if B <= 8:
        TB = B                               # single block == full batch dim
    else:
        TB = min(32, _round_up(B, 8))        # v7x-safe VMEM tile, multiple of 8
    B_pad = _round_up(B, TB)
    grid = B_pad // TB

    # ---- wrapper glue (plain JAX / XLA) ----
    x2d = x[:, 0, :].astype(jnp.float32)                          # (B, L)
    if B_pad > B:
        x2d = jnp.pad(x2d, ((0, B_pad - B), (0, 0)))
    x_padded = jnp.pad(x2d, ((0, 0), (pad, pad)))                 # (B_pad, Lp)
    # im2col: window t covers x_padded[:, t*S : t*S + K].
    t_idx = jnp.arange(T_out)[:, None] * S + jnp.arange(K)[None, :]
    patches = x_padded[:, t_idx]                                  # (B_pad, T_out, K)
    if T_pad > T_out:
        patches = jnp.pad(patches, ((0, 0), (0, T_pad - T_out), (0, 0)))
    patches2d = patches.reshape(B_pad * T_pad, K).astype(jnp.bfloat16)

    w_conv_kf = jnp.transpose(w_conv[:, 0, :])                    # (K, F)
    w_conv_kf = jnp.pad(w_conv_kf, ((0, 0), (0, F_pad - F))).astype(jnp.bfloat16)
    b_conv_1f = jnp.pad(b_conv, (0, F_pad - F)).reshape(1, F_pad).astype(jnp.float32)
    w_fc_fc = jnp.pad(jnp.transpose(w_fc),
                      ((0, F_pad - F), (0, C_pad - C))).astype(jnp.bfloat16)
    b_fc_1c = jnp.pad(b_fc, (0, C_pad - C)).reshape(1, C_pad).astype(jnp.float32)

    kernel = _make_cnn_kernel(TB=TB, T_pad=T_pad, T_out=T_out, F_pad=F_pad)

    pooled_p, logits_p = pl.pallas_call(
        kernel,
        out_shape=(
            jax.ShapeDtypeStruct((B_pad, F_pad), jnp.float32),
            jax.ShapeDtypeStruct((B_pad, C_pad), jnp.float32),
        ),
        grid_spec=pltpu.PrefetchScalarGridSpec(
            num_scalar_prefetch=0,
            grid=(grid,),
            in_specs=[
                # Batch-tiled patch slab; weights/biases pinned at block (0, 0)
                # so they stay VMEM-resident across the batch grid.
                pl.BlockSpec((TB * T_pad, K), lambda i: (i, 0)),
                pl.BlockSpec((K, F_pad), lambda i: (0, 0)),
                pl.BlockSpec((1, F_pad), lambda i: (0, 0)),
                pl.BlockSpec((F_pad, C_pad), lambda i: (0, 0)),
                pl.BlockSpec((1, C_pad), lambda i: (0, 0)),
            ],
            out_specs=(
                pl.BlockSpec((TB, F_pad), lambda i: (i, 0)),
                pl.BlockSpec((TB, C_pad), lambda i: (i, 0)),
            ),
        ),
        compiler_params=pltpu.CompilerParams(
            dimension_semantics=("parallel",),
            vmem_limit_bytes=32 * 1024 * 1024,
        ),
    )(patches2d, w_conv_kf, b_conv_1f, w_fc_fc, b_fc_1c)

    return pooled_p[:B, :F], logits_p[:B, :C]


def _reference(x, w_conv, b_conv, w_fc, b_fc, *, kernel_size, stride):
    """Plain-JAX f32 reference mirroring the PyTorch forward (eval mode)."""
    B, _, L = x.shape
    F, _, K = w_conv.shape
    pad = kernel_size - stride
    x_pad = jnp.pad(x[:, 0, :], ((0, 0), (pad, pad)))
    T_out = (L + 2 * pad - K) // stride + 1
    t_idx = jnp.arange(T_out)[:, None] * stride + jnp.arange(K)[None, :]
    patches = x_pad[:, t_idx]                                     # (B, T, K)
    conv = jnp.einsum("btk,fk->btf", patches, w_conv[:, 0, :]) + b_conv
    relu = jnp.maximum(conv, 0.0)
    pooled = jnp.mean(relu, axis=1)                               # (B, F)
    logits = pooled @ w_fc.T + b_fc
    return pooled, logits


if __name__ == "__main__":
    # Small, module-consistent hyperparameters (scaled-down conv_k_size etc.)
    B = 2
    L = 128          # raw waveform length
    K = 32           # conv_k_size
    S = 16           # conv_step
    F = 32           # filter_num
    C = 5            # type_number (adaptive_size = 1)

    key = jax.random.PRNGKey(0)
    k_x, k_wc, k_bc, k_wf, k_bf = jax.random.split(key, 5)

    x = jax.random.normal(k_x, (B, 1, L), dtype=jnp.float32)
    w_conv = jax.random.normal(k_wc, (F, 1, K), dtype=jnp.float32) * 0.05
    b_conv = jax.random.normal(k_bc, (F,), dtype=jnp.float32) * 0.05
    w_fc = jax.random.normal(k_wf, (C, F), dtype=jnp.float32) * 0.1
    b_fc = jax.random.normal(k_bf, (C,), dtype=jnp.float32) * 0.1

    pooled, logits = cnn_forward(x, w_conv, b_conv, w_fc, b_fc,
                                 kernel_size=K, stride=S)
    jax.block_until_ready((pooled, logits))

    ref_pooled, ref_logits = _reference(x, w_conv, b_conv, w_fc, b_fc,
                                        kernel_size=K, stride=S)
    assert pooled.shape == (B, F) and logits.shape == (B, C)
    # bf16 MXU operands with f32 accumulation -> relaxed tolerance vs f32 ref.
    assert jnp.allclose(pooled, ref_pooled, atol=3e-2, rtol=3e-2)
    assert jnp.allclose(logits, ref_logits, atol=3e-2, rtol=3e-2)

    print("KERNEL_OK")
</pallas_src>

<mosaic_0001>
module attributes {stable_mosaic.version = 11 : i64} {
  func.func @kernel(%arg0: i32, %arg1: memref<32x32xbf16, #tpu.memory_space<vmem>>, %arg2: memref<32x128xbf16, #tpu.memory_space<vmem>>, %arg3: memref<1x128xf32, #tpu.memory_space<vmem>>, %arg4: memref<128x128xbf16, #tpu.memory_space<vmem>>, %arg5: memref<1x128xf32, #tpu.memory_space<vmem>>, %arg6: memref<2x128xf32, #tpu.memory_space<vmem>>, %arg7: memref<2x128xf32, #tpu.memory_space<vmem>>) attributes {dimension_semantics = [#tpu.dimension_semantics<parallel>], iteration_bounds = array<i64: 1>, scalar_prefetch = 0 : i64, scratch_operands = 0 : i64, tpu.core_type = #tpu.core_type<tc>, window_params = [{transform_indices = @transform_0, window_bounds = array<i64: 32, 32>}, {pipeline_mode = #tpu.pipeline_mode<synchronous>, transform_indices = @transform_1, window_bounds = array<i64: 32, 128>}, {pipeline_mode = #tpu.pipeline_mode<synchronous>, transform_indices = @transform_2, window_bounds = array<i64: 1, 128>}, {pipeline_mode = #tpu.pipeline_mode<synchronous>, transform_indices = @transform_3, window_bounds = array<i64: 128, 128>}, {pipeline_mode = #tpu.pipeline_mode<synchronous>, transform_indices = @transform_4, window_bounds = array<i64: 1, 128>}, {transform_indices = @transform_5, window_bounds = array<i64: 2, 128>}, {transform_indices = @transform_6, window_bounds = array<i64: 2, 128>}]} {
    %c0 = arith.constant 0 : index
    %c0_0 = arith.constant 0 : index
    %0 = vector.load %arg1[%c0, %c0_0] : memref<32x32xbf16, #tpu.memory_space<vmem>>, vector<32x32xbf16>
    %c0_1 = arith.constant 0 : index
    %c0_2 = arith.constant 0 : index
    %1 = vector.load %arg2[%c0_1, %c0_2] : memref<32x128xbf16, #tpu.memory_space<vmem>>, vector<32x128xbf16>
    %cst = arith.constant dense<0.000000e+00> : vector<32x128xf32>
    %2 = tpu.matmul %0, %1, %cst {dimension_numbers = #tpu.dot_dimension_numbers<[1], [0], [0], [1], [0, 0, 1, 1], [], []>} : vector<32x32xbf16>, vector<32x128xbf16>, vector<32x128xf32> -> vector<32x128xf32>
    %c0_3 = arith.constant 0 : index
    %c0_4 = arith.constant 0 : index
    %3 = vector.load %arg3[%c0_3, %c0_4] : memref<1x128xf32, #tpu.memory_space<vmem>>, vector<1x128xf32>
    %4 = vector.broadcast %3 : vector<1x128xf32> to vector<32x128xf32>
    %5 = arith.addf %2, %4 : vector<32x128xf32>
    %cst_5 = arith.constant 0.000000e+00 : f32
    %6 = vector.broadcast %cst_5 : f32 to vector<32x128xf32>
    %7 = arith.maximumf %5, %6 : vector<32x128xf32>
    %8 = vector.shape_cast %7 : vector<32x128xf32> to vector<2x16x128xf32>
    %9 = tpu.iota {dimensions = array<i32: 1>} : vector<2x16x128xi32>
    %c9_i32 = arith.constant 9 : i32
    %10 = vector.broadcast %c9_i32 : i32 to vector<2x16x128xi32>
    %11 = arith.cmpi slt, %9, %10 : vector<2x16x128xi32>
    %cst_6 = arith.constant 0.000000e+00 : f32
    %12 = vector.broadcast %cst_6 : f32 to vector<2x16x128xf32>
    %13 = arith.select %11, %8, %12 : vector<2x16x128xi1>, vector<2x16x128xf32>
    %cst_7 = arith.constant dense<0.000000e+00> : vector<2x128xf32>
    %14 = vector.multi_reduction <add>, %13, %cst_7 [1] : vector<2x16x128xf32> to vector<2x128xf32>
    %cst_8 = arith.constant 0.111111112 : f32
    %15 = vector.broadcast %cst_8 : f32 to vector<2x128xf32>
    %16 = arith.mulf %14, %15 : vector<2x128xf32>
    %c0_9 = arith.constant 0 : index
    %c0_10 = arith.constant 0 : index
    %17 = vector.load %arg6[%c0_9, %c0_10] : memref<2x128xf32, #tpu.memory_space<vmem>>, vector<2x128xf32>
    tpu.vector_store %arg6[%c0_9, %c0_10], %16 {strides = array<i32>} : memref<2x128xf32, #tpu.memory_space<vmem>>, vector<2x128xf32>,
    %18 = arith.truncf %16 : vector<2x128xf32> to vector<2x128xbf16>
    %c0_11 = arith.constant 0 : index
    %c0_12 = arith.constant 0 : index
    %19 = vector.load %arg4[%c0_11, %c0_12] : memref<128x128xbf16, #tpu.memory_space<vmem>>, vector<128x128xbf16>
    %cst_13 = arith.constant dense<0.000000e+00> : vector<2x128xf32>
    %20 = tpu.matmul %18, %19, %cst_13 {dimension_numbers = #tpu.dot_dimension_numbers<[1], [0], [0], [1], [0, 0, 1, 1], [], []>} : vector<2x128xbf16>, vector<128x128xbf16>, vector<2x128xf32> -> vector<2x128xf32>
    %c0_14 = arith.constant 0 : index
    %c0_15 = arith.constant 0 : index
    %21 = vector.load %arg5[%c0_14, %c0_15] : memref<1x128xf32, #tpu.memory_space<vmem>>, vector<1x128xf32>
    %22 = vector.broadcast %21 : vector<1x128xf32> to vector<2x128xf32>
    %23 = arith.addf %20, %22 : vector<2x128xf32>
    %c0_16 = arith.constant 0 : index
    %c0_17 = arith.constant 0 : index
    %24 = vector.load %arg7[%c0_16, %c0_17] : memref<2x128xf32, #tpu.memory_space<vmem>>, vector<2x128xf32>
    tpu.vector_store %arg7[%c0_16, %c0_17], %23 {strides = array<i32>} : memref<2x128xf32, #tpu.memory_space<vmem>>, vector<2x128xf32>,
    return
  }
  func.func @transform_0(%arg0: i32) -> (i32, i32) {
    %c0_i32 = arith.constant 0 : i32
    %c0_i32_0 = arith.constant 0 : i32
    return %arg0, %c0_i32 : i32, i32
  }
  func.func @transform_1(%arg0: i32) -> (i32, i32) {
    %c0_i32 = arith.constant 0 : i32
    %c0_i32_0 = arith.constant 0 : i32
    %c0_i32_1 = arith.constant 0 : i32
    return %c0_i32, %c0_i32_0 : i32, i32
  }
  func.func @transform_2(%arg0: i32) -> (i32, i32) {
    %c0_i32 = arith.constant 0 : i32
    %c0_i32_0 = arith.constant 0 : i32
    %c0_i32_1 = arith.constant 0 : i32
    return %c0_i32, %c0_i32_0 : i32, i32
  }
  func.func @transform_3(%arg0: i32) -> (i32, i32) {
    %c0_i32 = arith.constant 0 : i32
    %c0_i32_0 = arith.constant 0 : i32
    %c0_i32_1 = arith.constant 0 : i32
    return %c0_i32, %c0_i32_0 : i32, i32
  }
  func.func @transform_4(%arg0: i32) -> (i32, i32) {
    %c0_i32 = arith.constant 0 : i32
    %c0_i32_0 = arith.constant 0 : i32
    %c0_i32_1 = arith.constant 0 : i32
    return %c0_i32, %c0_i32_0 : i32, i32
  }
  func.func @transform_5(%arg0: i32) -> (i32, i32) {
    %c0_i32 = arith.constant 0 : i32
    %c0_i32_0 = arith.constant 0 : i32
    return %arg0, %c0_i32 : i32, i32
  }
  func.func @transform_6(%arg0: i32) -> (i32, i32) {
    %c0_i32 = arith.constant 0 : i32
    %c0_i32_0 = arith.constant 0 : i32
    return %arg0, %c0_i32 : i32, i32
  }
}

</mosaic_0001>

<llo_original>
// kernel: tpu_custom_call.1
$region0: #{tpu_custom_call.1}
  #allocation0 [shape = 'u32[]', space=smem, size = 0x4, offset = 0x4, fixed_abs, tag = 'smem constant byte address 0x4 - core index']
  #allocation1 [shape = 'u32[144,128]{1,0:T(1,128)}', space=vmem, size = 0x12000, scoped, tag = 'internal scratch']
  %s0 = inlined_call_operand.hbm [shape: bf16[32,32], index: 0, kind: input, shape index: {}]
  %s1 = inlined_call_operand.hbm [shape: bf16[32,128], index: 1, kind: input, shape index: {}]
  %s2 = inlined_call_operand.vmem [shape: f32[1,128], index: 2, kind: input, shape index: {}]
  %s3 = inlined_call_operand.hbm [shape: bf16[128,128], index: 3, kind: input, shape index: {}]
  %s4 = inlined_call_operand.vmem [shape: f32[1,128], index: 4, kind: input, shape index: {}]
  %s5 = inlined_call_operand.hbm [shape: f32[2,128], index: 5, kind: output, shape index: {0}]
  %s6 = inlined_call_operand.hbm [shape: f32[2,128], index: 6, kind: output, shape index: {1}]
  %7 = xla_tuple %s5, %s6
  %s8 = sld [smem:[#allocation0]]
  $region50: #{tpu_custom_call.1} parent=0
    _
  %s10 = ssub.s32 1, %s8
  %s11 = scalar_select 0, %s10, %s8
  $region1: #{tpu_custom_call.1} parent=0
    #allocation2 [shape = 'u8[8192]{0}', space=vmem, size = 0x2000, scoped, tag = 'input window, operand 0, single buffered']
    #allocation3 [shape = 's32[1]{0}', space=sflag, size = 0x4, scoped, tag = 'scoped memory for tpu_custom_call.1']
    #allocation4 [shape = 's32[1]{0}', space=sflag, size = 0x4, scoped, tag = 'scoped memory for tpu_custom_call.1']
    #allocation5 [shape = 'u8[8192]{0}', space=vmem, size = 0x2000, scoped, tag = 'input window, operand 1, single buffered']
    #allocation6 [shape = 's32[1]{0}', space=sflag, size = 0x4, scoped, tag = 'scoped memory for tpu_custom_call.1']
    #allocation7 [shape = 'u8[32768]{0}', space=vmem, size = 0x8000, scoped, tag = 'input window, operand 3, single buffered']
    #allocation8 [shape = 'u8[1024]{0}', space=vmem, size = 0x400, scoped, tag = 'output window, operand 0, single buffered']
    #allocation9 [shape = 'u8[1024]{0}', space=vmem, size = 0x400, scoped, tag = 'output window, operand 1, single buffered']
    #allocation10 [shape = 's32[1]{0}', space=sflag, size = 0x4, scoped, tag = 'scoped memory for tpu_custom_call.1']
    %12 = vsyncpa [#allocation3], 0
    %13 = vsyncpa [#allocation6], 0
    %14 = vsyncpa [#allocation4], 0
    %15 = vsyncpa [#allocation10], 0
    // Predicated region
    $region2: #{tpu_custom_call.1} parent=1 // pred_check
      _
    $region3: #{tpu_custom_call.1} parent=1 // pred_check_branch
      %17 = sbr.rel (0) target = $region5
    $region4: #{tpu_custom_call.1} parent=1 // pred_region
      %s19 = ssub.s32 256, 256
      %20 = vsyncadd [#allocation3], %s19
      %s21 = sshll.u32 [#allocation2], 4
      %s22 = int_to_ptr.vmem [resolvable:$true] %s21
      %27 = dma.hbm_to_vmem [thread:$0]  %s0, 256, %s22, [#allocation3], 64, 64, 4
    $region5: #{tpu_custom_call.1} parent=1 // pred_fallthru
      _
    // Predicated region
    $region6: #{tpu_custom_call.1} parent=1 // pred_check
      _
    $region7: #{tpu_custom_call.1} parent=1 // pred_check_branch
      %29 = sbr.rel (0) target = $region9
    $region8: #{tpu_custom_call.1} parent=1 // pred_region
      %s31 = ssub.s32 256, 256
      %32 = vsyncadd [#allocation6], %s31
      %s33 = sshll.u32 [#allocation5], 4
      %s34 = int_to_ptr.vmem [resolvable:$true] %s33
      %39 = dma.hbm_to_vmem [thread:$0]  %s1, 256, %s34, [#allocation6], 64, 64, 4
    $region9: #{tpu_custom_call.1} parent=1 // pred_fallthru
      _
    // Predicated region
    $region10: #{tpu_custom_call.1} parent=1 // pred_check
      _
    $region11: #{tpu_custom_call.1} parent=1 // pred_check_branch
      %41 = sbr.rel (0) target = $region13
    $region12: #{tpu_custom_call.1} parent=1 // pred_region
      _
    $region13: #{tpu_custom_call.1} parent=1 // pred_fallthru
      _
    // Predicated region
    $region14: #{tpu_custom_call.1} parent=1 // pred_check
      _
    $region15: #{tpu_custom_call.1} parent=1 // pred_check_branch
      %43 = sbr.rel (0) target = $region17
    $region16: #{tpu_custom_call.1} parent=1 // pred_region
      %s45 = ssub.s32 1024, 1024
      %46 = vsyncadd [#allocation6], %s45
      %s47 = sshll.u32 [#allocation7], 4
      %s48 = int_to_ptr.vmem [resolvable:$true] %s47
      %53 = dma.hbm_to_vmem [thread:$0]  %s3, 1024, %s48, [#allocation6], 64, 64, 4
    $region17: #{tpu_custom_call.1} parent=1 // pred_fallthru
      _
    // Predicated region
    $region18: #{tpu_custom_call.1} parent=1 // pred_check
      _
    $region19: #{tpu_custom_call.1} parent=1 // pred_check_branch
      %55 = sbr.rel (0) target = $region21
    $region20: #{tpu_custom_call.1} parent=1 // pred_region
      _
    $region21: #{tpu_custom_call.1} parent=1 // pred_fallthru
      _
    // Predicated region
    $region22: #{tpu_custom_call.1} parent=1 // pred_check
      _
    $region23: #{tpu_custom_call.1} parent=1 // pred_check_branch
      %57 = sbr.rel (0) target = $region25
    $region24: #{tpu_custom_call.1} parent=1 // pred_region
      %58 = dma.done [#allocation3], 256
    $region25: #{tpu_custom_call.1} parent=1 // pred_fallthru
      _
    // Predicated region
    $region26: #{tpu_custom_call.1} parent=1 // pred_check
      _
    $region27: #{tpu_custom_call.1} parent=1 // pred_check_branch
      %60 = sbr.rel (0) target = $region29
    $region28: #{tpu_custom_call.1} parent=1 // pred_region
      %61 = dma.done [#allocation6], 256
    $region29: #{tpu_custom_call.1} parent=1 // pred_fallthru
      _
    // Predicated region
    $region30: #{tpu_custom_call.1} parent=1 // pred_check
      _
    $region31: #{tpu_custom_call.1} parent=1 // pred_check_branch
      %63 = sbr.rel (0) target = $region33
    $region32: #{tpu_custom_call.1} parent=1 // pred_region
      %64 = dma.done [#allocation6], 1024
    $region33: #{tpu_custom_call.1} parent=1 // pred_fallthru
      _
    %v66 = vld [vmem:[#allocation2] sm:$0xf]
    %v67 = vld [vmem:[#allocation2 + $0x4] sm:$0xf]
    %v68 = vld [vmem:[#allocation2 + $0x8] sm:$0xf]
    %v69 = vld [vmem:[#allocation2 + $0xc] sm:$0xf]
    %v70 = vld [vmem:[#allocation5] sm:$0xf]
    %v71 = vld [vmem:[#allocation5 + $0x4] sm:$0xf]
    %v72 = vld [vmem:[#allocation5 + $0x8] sm:$0xf]
    %v73 = vld [vmem:[#allocation5 + $0xc] sm:$0xf]
    %v74 = vld [vmem:[%s2] sm:$0x1]
    %v76 = vlaneseq
    %v77 = vshrl.u32 %v76, 7
    %v78 = vsub.s32 0, %v77
    %v79 = vrot.slane %v74, %v78
    %v85 = vunpack.c.l.b16 %v66
    %v86 = vunpack.c.l.b16 %v67
    %v87 = vunpack.c.l.b16 %v68
    %v88 = vunpack.c.l.b16 %v69
    %v89 = vpack.c.b16 %v86, %v85
    %v90 = vpack.c.b16 %v88, %v87
    %v95 = vunpack.c.l.b16 %v70
    %v96 = vunpack.c.l.b16 %v71
    %v97 = vunpack.c.l.b16 %v72
    %v98 = vunpack.c.l.b16 %v73
    %v99 = vpack.c.b16 %v96, %v95
    %v100 = vpack.c.b16 %v98, %v97
    %vm103 = vcmask 261120
    %v105 = vsel %vm103, %v89, 0
    %v108 = vsel %vm103, %v90, 0
    %110 = vmatprep.subr.bf16.mxu0 0
    %111 = vmatpush1.bf16.msra.mxu0 %v99
    %112 = vmatprep.subr.bf16.mxu0 0
    %113 = vmatpush1.bf16.msra.mxu0 %v100
    %114 = vmatprep.subr.bf16.mxu0 0
    %115 = vmatpush1.bf16.msra.mxu0 0
    %116 = vmatprep.subr.bf16.mxu0 0
    %117 = vmatpush1.bf16.msra.mxu0 0
    %118 = vmatprep.subr.bf16.mxu0 0
    %119 = vmatpush1.bf16.msra.mxu0 0
    %120 = vmatprep.subr.bf16.mxu0 0
    %121 = vmatpush1.bf16.msra.mxu0 0
    %122 = vmatprep.subr.bf16.mxu0 0
    %123 = vmatpush1.bf16.msra.mxu0 0
    %124 = vmatprep.subr.bf16.mxu0 0
    %125 = vmatpush1.bf16.msra.mxu0 0
    %126 = vmatprep.subr.bf16.mxu0 0
    %127 = vmatpush1.bf16.msra.mxu0 0
    %128 = vmatprep.subr.bf16.mxu0 0
    %129 = vmatpush1.bf16.msra.mxu0 0
    %130 = vmatprep.subr.bf16.mxu0 0
    %131 = vmatpush1.bf16.msra.mxu0 0
    %132 = vmatprep.subr.bf16.mxu0 0
    %133 = vmatpush1.bf16.msra.mxu0 0
    %134 = vmatprep.subr.bf16.mxu0 0
    %135 = vmatpush1.bf16.msra.mxu0 0
    %136 = vmatprep.subr.bf16.mxu0 0
    %137 = vmatpush1.bf16.msra.mxu0 0
    %138 = vmatprep.subr.bf16.mxu0 0
    %139 = vmatpush1.bf16.msra.mxu0 0
    %140 = vmatprep.subr.bf16.mxu0 0
    %141 = vmatpush1.bf16.msra.mxu0 0
    %142 = vmatprep.mubr.bf16.mxu0 0
    %143 = vmatmul.mubr.bf16.gmra.mrb[0].mxu0 %v105
    %v144 = vpop.f32.mrb[0].mxu0
    %v145 = vadd.f32 %v79, %v144
    %v146 = vpop.f32.mrb[0].mxu0
    %v147 = vpop.f32.mrb[0].mxu0
    %v148 = vadd.f32 %v79, %v147
    %v149 = vpop.f32.mrb[0].mxu0
    %150 = vmatprep.mubr.bf16.mxu0 0
    %151 = vmatmul.mubr.bf16.gmra.mrb[0].mxu0 %v108
    %v152 = vpop.f32.mrb[0].mxu0
    %v153 = vadd.f32 %v79, %v152
    %v154 = vpop.f32.mrb[0].mxu0
    %v155 = vpop.f32.mrb[0].mxu0
    %v156 = vadd.f32 %v79, %v155
    %v157 = vpop.f32.mrb[0].mxu0
    %158 = vdwg.mxu0
    %v159 = vmax.f32 %v145, 0.0
    %v160 = vmax.f32 %v148, 0.0
    %v161 = vmax.f32 %v153, 0.0
    %v162 = vmax.f32 %v156, 0.0
    %v163 = vlaneseq
    %v164 = vshrl.u32 %v163, 7
    %v165 = vadd.s32 %v164, 8
    %vm166 = vcmp.lt.s32.totalorder %v164, 9
    %vm167 = vcmp.lt.s32.totalorder %v165, 9
    %v168 = vsel %vm166, %v159, 0.0
    %v169 = vsel %vm167, %v160, 0.0
    %v170 = vsel %vm166, %v161, 0.0
    %v171 = vsel %vm167, %v162, 0.0
    %v172 = vadd.f32 %v168, %v169
    %v173 = vrot.slane %v172, 4
    %v174 = vadd.f32 %v172, %v173
    %v175 = vrot.slane %v174, 2
    %v176 = vadd.f32 %v174, %v175
    %v177 = vrot.slane %v176, 1
    %v178 = vadd.f32 %v176, %v177
    %v179 = vadd.f32 %v170, %v171
    %v180 = vrot.slane %v179, 4
    %v181 = vadd.f32 %v179, %v180
    %v182 = vrot.slane %v181, 2
    %v183 = vadd.f32 %v181, %v182
    %v184 = vrot.slane %v183, 1
    %v185 = vadd.f32 %v183, %v184
    %v186 = vmul.f32 %v178, 0.11111111
    %v187 = vmul.f32 %v185, 0.11111111
    %vm190 = vcmask 1041409
    %v191 = vsel %vm190, %v187, %v186
    %193 = vst [vmem:[#allocation8] sm:$0x3] %v191
    %v194 = vpack.c.bf16 %v186, %v186
    %v195 = vpack.c.bf16 %v187, %v187
    %v196 = vld [vmem:[#allocation7] sm:$0xf]
    %v197 = vld [vmem:[#allocation7 + $0x4] sm:$0xf]
    %v198 = vld [vmem:[#allocation7 + $0x8] sm:$0xf]
    %v199 = vld [vmem:[#allocation7 + $0xc] sm:$0xf]
    %v200 = vld [vmem:[#allocation7 + $0x10] sm:$0xf]
    %v201 = vld [vmem:[#allocation7 + $0x14] sm:$0xf]
    %v202 = vld [vmem:[#allocation7 + $0x18] sm:$0xf]
    %v203 = vld [vmem:[#allocation7 + $0x1c] sm:$0xf]
    %v204 = vld [vmem:[#allocation7 + $0x20] sm:$0xf]
    %v205 = vld [vmem:[#allocation7 + $0x24] sm:$0xf]
    %v206 = vld [vmem:[#allocation7 + $0x28] sm:$0xf]
    %v207 = vld [vmem:[#allocation7 + $0x2c] sm:$0xf]
    %v208 = vld [vmem:[#allocation7 + $0x30] sm:$0xf]
    %v209 = vld [vmem:[#allocation7 + $0x34] sm:$0xf]
    %v210 = vld [vmem:[#allocation7 + $0x38] sm:$0xf]
    %v211 = vld [vmem:[#allocation7 + $0x3c] sm:$0xf]
    %v212 = vld [vmem:[%s4] sm:$0x1]
    %v214 = vlaneseq
    %v215 = vshrl.u32 %v214, 7
    %v216 = vsub.s32 0, %v215
    %v217 = vrot.slane %v212, %v216
    %v221 = vunpack.c.l.b16 %v194
    %v222 = vunpack.c.l.b16 %v195
    %v223 = vsel %vm190, %v222, %v221
    %v224 = vpack.c.b16 %v223, %v223
    %v242 = vunpack.c.l.b16 %v196
    %v243 = vunpack.c.l.b16 %v197
    %v244 = vunpack.c.l.b16 %v198
    %v245 = vunpack.c.l.b16 %v199
    %v246 = vunpack.c.l.b16 %v200
    %v247 = vunpack.c.l.b16 %v201
    %v248 = vunpack.c.l.b16 %v202
    %v249 = vunpack.c.l.b16 %v203
    %v250 = vunpack.c.l.b16 %v204
    %v251 = vunpack.c.l.b16 %v205
    %v252 = vunpack.c.l.b16 %v206
    %v253 = vunpack.c.l.b16 %v207
    %v254 = vunpack.c.l.b16 %v208
    %v255 = vunpack.c.l.b16 %v209
    %v256 = vunpack.c.l.b16 %v210
    %v257 = vunpack.c.l.b16 %v211
    %v258 = vpack.c.b16 %v243, %v242
    %v259 = vpack.c.b16 %v245, %v244
    %v260 = vpack.c.b16 %v247, %v246
    %v261 = vpack.c.b16 %v249, %v248
    %v262 = vpack.c.b16 %v251, %v250
    %v263 = vpack.c.b16 %v253, %v252
    %v264 = vpack.c.b16 %v255, %v254
    %v265 = vpack.c.b16 %v257, %v256
    %274 = vmatprep.subr.bf16.mxu0 0
    %275 = vmatpush1.bf16.msra.mxu0 %v258
    %276 = vmatprep.subr.bf16.mxu0 0
    %277 = vmatpush1.bf16.msra.mxu0 %v259
    %278 = vmatprep.subr.bf16.mxu0 0
    %279 = vmatpush1.bf16.msra.mxu0 %v260
    %280 = vmatprep.subr.bf16.mxu0 0
    %281 = vmatpush1.bf16.msra.mxu0 %v261
    %282 = vmatprep.subr.bf16.mxu0 0
    %283 = vmatpush1.bf16.msra.mxu0 %v262
    %284 = vmatprep.subr.bf16.mxu0 0
    %285 = vmatpush1.bf16.msra.mxu0 %v263
    %286 = vmatprep.subr.bf16.mxu0 0
    %287 = vmatpush1.bf16.msra.mxu0 %v264
    %288 = vmatprep.subr.bf16.mxu0 0
    %289 = vmatpush1.bf16.msra.mxu0 %v265
    %290 = vmatprep.subr.bf16.mxu0 0
    %291 = vmatpush1.bf16.msra.mxu0 0
    %292 = vmatprep.subr.bf16.mxu0 0
    %293 = vmatpush1.bf16.msra.mxu0 0
    %294 = vmatprep.subr.bf16.mxu0 0
    %295 = vmatpush1.bf16.msra.mxu0 0
    %296 = vmatprep.subr.bf16.mxu0 0
    %297 = vmatpush1.bf16.msra.mxu0 0
    %298 = vmatprep.subr.bf16.mxu0 0
    %299 = vmatpush1.bf16.msra.mxu0 0
    %300 = vmatprep.subr.bf16.mxu0 0
    %301 = vmatpush1.bf16.msra.mxu0 0
    %302 = vmatprep.subr.bf16.mxu0 0
    %303 = vmatpush1.bf16.msra.mxu0 0
    %304 = vmatprep.subr.bf16.mxu0 0
    %305 = vmatpush1.bf16.msra.mxu0 0
    %306 = vmatprep.mubr.bf16.mxu0 0
    %307 = vmatmul.mubr.bf16.gmra.mrb[0].mxu0 %v224
    %v308 = vpop.f32.mrb[0].mxu0
    %v309 = vadd.f32 %v217, %v308
    %v310 = vpop.f32.mrb[0].mxu0
    %v311 = vpop.f32.mrb[0].mxu0
    %v312 = vpop.f32.mrb[0].mxu0
    %313 = vdwg.mxu0
    %314 = vst [vmem:[#allocation9] sm:$0x3] %v309
    // Predicated region
    $region34: #{tpu_custom_call.1} parent=1 // pred_check
      _
    $region35: #{tpu_custom_call.1} parent=1 // pred_check_branch
      %316 = sbr.rel (0) target = $region37
    $region36: #{tpu_custom_call.1} parent=1 // pred_region
      %s318 = ssub.s32 32, 32
      %319 = vsyncadd [#allocation4], %s318
      %s321 = sshll.u32 [#allocation8], 4
      %s322 = int_to_ptr.vmem [resolvable:$true] %s321
      %324 = dma.vmem_to_hbm [thread:$0]  %s322, 32, %s5, [#allocation4]
    $region37: #{tpu_custom_call.1} parent=1 // pred_fallthru
      _
    // Predicated region
    $region38: #{tpu_custom_call.1} parent=1 // pred_check
      _
    $region39: #{tpu_custom_call.1} parent=1 // pred_check_branch
      %326 = sbr.rel (0) target = $region41
    $region40: #{tpu_custom_call.1} parent=1 // pred_region
      %s328 = ssub.s32 32, 32
      %329 = vsyncadd [#allocation10], %s328
      %s331 = sshll.u32 [#allocation9], 4
      %s332 = int_to_ptr.vmem [resolvable:$true] %s331
      %334 = dma.vmem_to_hbm [thread:$0]  %s332, 32, %s6, [#allocation10]
    $region41: #{tpu_custom_call.1} parent=1 // pred_fallthru
      _
    // Predicated region
    $region42: #{tpu_custom_call.1} parent=1 // pred_check
      _
    $region43: #{tpu_custom_call.1} parent=1 // pred_check_branch
      %336 = sbr.rel (0) target = $region45
    $region44: #{tpu_custom_call.1} parent=1 // pred_region
      %337 = dma.done [#allocation4], 32
    $region45: #{tpu_custom_call.1} parent=1 // pred_fallthru
      _
    // Predicated region
    $region46: #{tpu_custom_call.1} parent=1 // pred_check
      _
    $region47: #{tpu_custom_call.1} parent=1 // pred_check_branch
      %339 = sbr.rel (0) target = $region49
    $region48: #{tpu_custom_call.1} parent=1 // pred_region
      %340 = dma.done [#allocation10], 32
    $region49: #{tpu_custom_call.1} parent=1 // pred_fallthru
      _
    %341 = vsyncpa [#allocation3], 1
    %342 = vsyncpa [#allocation6], 1
    %343 = vsyncpa [#allocation4], 1
    %344 = vsyncpa [#allocation10], 1

</llo_original>
